<compile_context>
chip_gen: v7x
topology: tpu7x:2x2x1
jax: 0.10.0
libtpu: 0.0.40
codegen_flags: <defaults>
</compile_context>

<pallas_src>
import jax
import jax.numpy as jnp
from jax.experimental import pallas as pl
from jax.experimental.pallas import tpu as pltpu  # noqa: F401  (TPU backend)


def _null_embedder_kernel(x_hbm_ref, o_hbm_ref):
    # NullEmbedder.forward(data) == data.
    # The output buffer aliases the input buffer (input_output_aliases={0: 0}),
    # so the result is already in place: nothing to load, compute, or store.
    # Intentionally empty body.
    del x_hbm_ref, o_hbm_ref


def null_embedder(data: jax.Array) -> jax.Array:
    """Pallas implementation of NullEmbedder.forward: returns `data` unchanged.

    Design:
      * memory_space=pl.ANY on both refs -> no HBM<->VMEM pipeline is built,
        no (8,128) block constraint, no tile-size / VMEM-limit tuning needed
        on v5e / v6e / v7x.
      * input_output_aliases={0: 0} -> output shares the input buffer, so the
        custom call moves ~0 bytes of HBM traffic.
      * cost_estimate advertises zero flops / zero bytes so XLA's scheduler
        treats the call as free and overlaps surrounding work.
    """
    return pl.pallas_call(
        _null_embedder_kernel,
        out_shape=jax.ShapeDtypeStruct(data.shape, data.dtype),
        in_specs=[pl.BlockSpec(memory_space=pl.ANY)],
        out_specs=pl.BlockSpec(memory_space=pl.ANY),
        input_output_aliases={0: 0},
        cost_estimate=pl.CostEstimate(
            flops=0, transcendentals=0, bytes_accessed=0
        ),
    )(data)


if __name__ == "__main__":
    key = jax.random.PRNGKey(0)
    # NCHW-style input consistent with a video/image embedder call site.
    x = jax.random.normal(key, (2, 4, 16, 16), dtype=jnp.float32)

    y = null_embedder(x)
    jax.block_until_ready(y)

    assert y.shape == x.shape, (y.shape, x.shape)
    assert y.dtype == x.dtype, (y.dtype, x.dtype)
    assert bool(jnp.all(y == x)), "identity kernel mismatch"

    print("KERNEL_OK")
</pallas_src>

<mosaic_0001>
module attributes {stable_mosaic.version = 11 : i64} {
  func.func @_null_embedder_kernel(%arg0: memref<2x4x16x16xf32, #tpu.memory_space<any>>, %arg1: memref<2x4x16x16xf32, #tpu.memory_space<any>>) attributes {dimension_semantics = [], scalar_prefetch = 0 : i64, scratch_operands = 0 : i64, tpu.core_type = #tpu.core_type<tc>} {
    return
  }
}

</mosaic_0001>

<llo_original>
// kernel: tpu_custom_call.1
$region0: #{tpu_custom_call.1}
  #allocation0 [shape = 'u32[]', space=smem, size = 0x4, offset = 0x4, fixed_abs, tag = 'smem constant byte address 0x4 - core index']
  #allocation1 [shape = 'u32[144,128]{1,0:T(1,128)}', space=vmem, size = 0x12000, scoped, tag = 'internal scratch']
  %s0 = inlined_call_operand.hbm [shape: f32[2,4,16,16], index: 0, kind: input, shape index: {}, may-alias: {0,1}]
  %s1 = inlined_call_operand.hbm [shape: f32[2,4,16,16], index: 1, kind: output, shape index: {}, may-alias: {0,1}]
  %s2 = sld [smem:[#allocation0]]
  $region2: #{tpu_custom_call.1} parent=0
    _
  %s4 = ssub.s32 1, %s2
  %s5 = scalar_select 0, %s4, %s2

</llo_original>
